<compile_context>
chip_gen: v5e
topology: v5e:2x2
jax: 0.10.0
libtpu: 0.0.40
codegen_flags: <defaults>
</compile_context>

<pallas_src>
import math

import numpy as np
import jax
import jax.numpy as jnp
from jax.experimental import pallas as pl
from jax.experimental.pallas import tpu as pltpu


# ----------------------------- small helpers --------------------------------

def _round_up(v, m):
    return (v + m - 1) // m * m


def _apply_act(x, act):
    # TODO(synk): jax.nn.gelu default is the tanh approximation; PyTorch
    # nn.GELU default is the exact erf form (small numerical drift).
    if act == 'none':
        return x
    if act == 'gelu':
        return jax.nn.gelu(x)
    if act == 'sigmoid':
        return jax.nn.sigmoid(x)
    if act == 'silu':
        return x * jax.nn.sigmoid(x)
    raise ValueError(act)


# ------------------------- tiled matmul (+bias, +act) ------------------------

def _mm_kernel_factory(act):
    def kernel(x_ref, w_ref, b_ref, o_ref, acc_ref):
        @pl.when(pl.program_id(2) == 0)
        def _init():
            acc_ref[...] = jnp.zeros_like(acc_ref)

        acc_ref[...] += jnp.dot(x_ref[...], w_ref[...],
                                preferred_element_type=jnp.float32)

        @pl.when(pl.program_id(2) == pl.num_programs(2) - 1)
        def _fin():
            y = acc_ref[...] + b_ref[...]
            o_ref[...] = _apply_act(y, act).astype(o_ref.dtype)
    return kernel


def pallas_matmul(x, w, b, act='none'):
    """y = act(x @ w + b). bf16 MXU inputs, f32 accumulate, tiled M/N/K."""
    M, K = x.shape
    N = w.shape[1]
    tm = min(256, _round_up(M, 16))
    tn = min(256, _round_up(N, 128))
    tk = min(512, _round_up(K, 128))
    Mp, Np, Kp = _round_up(M, tm), _round_up(N, tn), _round_up(K, tk)
    xp = jnp.pad(x.astype(jnp.bfloat16), ((0, Mp - M), (0, Kp - K)))
    wp = jnp.pad(w.astype(jnp.bfloat16), ((0, Kp - K), (0, Np - N)))
    bp = jnp.pad(b.reshape(1, N).astype(jnp.float32), ((0, 0), (0, Np - N)))
    grid = (Mp // tm, Np // tn, Kp // tk)
    out = pl.pallas_call(
        _mm_kernel_factory(act),
        grid=grid,
        in_specs=[pl.BlockSpec((tm, tk), lambda i, j, k: (i, k)),
                  pl.BlockSpec((tk, tn), lambda i, j, k: (k, j)),
                  pl.BlockSpec((1, tn), lambda i, j, k: (0, j))],
        out_specs=pl.BlockSpec((tm, tn), lambda i, j, k: (i, j)),
        out_shape=jax.ShapeDtypeStruct((Mp, Np), jnp.float32),
        scratch_shapes=[pltpu.VMEM((tm, tn), jnp.float32)],
        compiler_params=pltpu.CompilerParams(
            dimension_semantics=("parallel", "parallel", "arbitrary")),
    )(xp, wp, bp)
    return out[:M, :N]


# --------------------- fused LayerNorm + matmul (+act) -----------------------

def _ln_mm_kernel_factory(act, c_real, eps):
    inv_c = 1.0 / float(c_real)

    def kernel(x_ref, g_ref, bb_ref, w_ref, b_ref, o_ref):
        x = x_ref[...]
        mu = jnp.sum(x, axis=-1, keepdims=True) * inv_c
        var = jnp.sum(x * x, axis=-1, keepdims=True) * inv_c - mu * mu
        xn = (x - mu) * jax.lax.rsqrt(var + eps)
        y = xn * g_ref[...] + bb_ref[...]
        o = jnp.dot(y.astype(jnp.bfloat16), w_ref[...],
                    preferred_element_type=jnp.float32) + b_ref[...]
        o_ref[...] = _apply_act(o, act).astype(o_ref.dtype)
    return kernel


def pallas_ln_matmul(x, gamma, beta, w, b, act='none', eps=1e-5):
    """act(LayerNorm(x) @ w + b), LN fused into the matmul kernel.
       K (the normalized dim) is kept in a single tile (fine for CoAtNet)."""
    M, K = x.shape
    N = w.shape[1]
    tm = min(256, _round_up(M, 16))
    tn = min(256, _round_up(N, 128))
    Kp = _round_up(K, 128)
    Mp, Np = _round_up(M, tm), _round_up(N, tn)
    xp = jnp.pad(x.astype(jnp.float32), ((0, Mp - M), (0, Kp - K)))
    gp = jnp.pad(gamma.reshape(1, K).astype(jnp.float32), ((0, 0), (0, Kp - K)))
    bbp = jnp.pad(beta.reshape(1, K).astype(jnp.float32), ((0, 0), (0, Kp - K)))
    wp = jnp.pad(w.astype(jnp.bfloat16), ((0, Kp - K), (0, Np - N)))
    bp = jnp.pad(b.reshape(1, N).astype(jnp.float32), ((0, 0), (0, Np - N)))
    out = pl.pallas_call(
        _ln_mm_kernel_factory(act, K, eps),
        grid=(Mp // tm, Np // tn),
        in_specs=[pl.BlockSpec((tm, Kp), lambda i, j: (i, 0)),
                  pl.BlockSpec((1, Kp), lambda i, j: (0, 0)),
                  pl.BlockSpec((1, Kp), lambda i, j: (0, 0)),
                  pl.BlockSpec((Kp, tn), lambda i, j: (0, j)),
                  pl.BlockSpec((1, tn), lambda i, j: (0, j))],
        out_specs=pl.BlockSpec((tm, tn), lambda i, j: (i, j)),
        out_shape=jax.ShapeDtypeStruct((Mp, Np), jnp.float32),
        compiler_params=pltpu.CompilerParams(
            dimension_semantics=("parallel", "parallel")),
    )(xp, gp, bbp, wp, bp)
    return out[:M, :N]


# ------------------ fused SE-scale + 1x1 projection matmul -------------------

def _se_proj_kernel(x_ref, s_ref, w_ref, b_ref, o_ref):
    x = x_ref[0] * s_ref[0]                      # (HWp, Kp) * (1, Kp)
    o = jnp.dot(x.astype(jnp.bfloat16), w_ref[...],
                preferred_element_type=jnp.float32) + b_ref[...]
    o_ref[0] = o.astype(o_ref.dtype)


def pallas_se_proj(x, s, w, b):
    """out[b] = (x[b] * s[b]) @ w + b  — SE sigmoid-scale fused into proj."""
    B, HW, K = x.shape
    N = w.shape[1]
    HWp = _round_up(HW, 16)
    Kp = _round_up(K, 128)
    Np = _round_up(N, 128)
    xp = jnp.pad(x.astype(jnp.float32), ((0, 0), (0, HWp - HW), (0, Kp - K)))
    sp = jnp.pad(s.astype(jnp.float32), ((0, 0), (0, Kp - K))).reshape(B, 1, Kp)
    wp = jnp.pad(w.astype(jnp.bfloat16), ((0, Kp - K), (0, Np - N)))
    bp = jnp.pad(b.reshape(1, N).astype(jnp.float32), ((0, 0), (0, Np - N)))
    out = pl.pallas_call(
        _se_proj_kernel,
        grid=(B,),
        in_specs=[pl.BlockSpec((1, HWp, Kp), lambda bi: (bi, 0, 0)),
                  pl.BlockSpec((1, 1, Kp), lambda bi: (bi, 0, 0)),
                  pl.BlockSpec((Kp, Np), lambda bi: (0, 0)),
                  pl.BlockSpec((1, Np), lambda bi: (0, 0))],
        out_specs=pl.BlockSpec((1, HWp, Np), lambda bi: (bi, 0, 0)),
        out_shape=jax.ShapeDtypeStruct((B, HWp, Np), jnp.float32),
        compiler_params=pltpu.CompilerParams(dimension_semantics=("parallel",)),
    )(xp, sp, wp, bp)
    return out[:, :HW, :N]


# -------------------------- depthwise 3x3 + GELU -----------------------------

def _dw_kernel_factory(H, W, C, act):
    def kernel(x_ref, w_ref, b_ref, o_ref):
        acc = jnp.zeros((H, W, C), jnp.float32)
        for kh in range(3):
            for kw in range(3):
                tap = x_ref[0, kh:kh + H, kw:kw + W, :]
                acc = acc + tap * w_ref[kh * 3 + kw]       # (H,W,C)*(1,1,C)
        acc = acc + b_ref[0]
        o_ref[0] = _apply_act(acc, act).astype(o_ref.dtype)
    return kernel


def pallas_dwconv3x3(x, w, b, act='gelu'):
    """Depthwise 3x3 conv, padding=1, stride 1 (caller subsamples for stride 2).
       9-tap accumulate happens in-kernel on a halo-padded NHWC block; no
       im2col materialization.  Grid over batch ("parallel")."""
    B, H, W, C = x.shape
    # TODO(synk): at large H/W this should tile H with a 1-row halo BlockSpec.
    xp = jnp.pad(x.astype(jnp.float32), ((0, 0), (1, 1), (1, 1), (0, 0)))
    wr = w.reshape(9, 1, 1, C).astype(jnp.float32)
    br = b.reshape(1, 1, C).astype(jnp.float32)
    return pl.pallas_call(
        _dw_kernel_factory(H, W, C, act),
        grid=(B,),
        in_specs=[pl.BlockSpec((1, H + 2, W + 2, C), lambda bi: (bi, 0, 0, 0)),
                  pl.BlockSpec((9, 1, 1, C), lambda bi: (0, 0, 0, 0)),
                  pl.BlockSpec((1, 1, C), lambda bi: (0, 0, 0))],
        out_specs=pl.BlockSpec((1, H, W, C), lambda bi: (bi, 0, 0, 0)),
        out_shape=jax.ShapeDtypeStruct((B, H, W, C), jnp.float32),
        compiler_params=pltpu.CompilerParams(dimension_semantics=("parallel",)),
    )(xp, wr, br)


# ------------------------- relative-bias attention ---------------------------

def _attn_kernel_factory(scale):
    def kernel(q_ref, k_ref, v_ref, bias_ref, o_ref):
        q = q_ref[0, 0]                                  # (Lp, Dp) bf16
        k = k_ref[0, 0]
        v = v_ref[0, 0]
        s = jnp.einsum('qd,kd->qk', q, k,
                       preferred_element_type=jnp.float32)
        s = s * scale + bias_ref[0]
        s = s - jnp.max(s, axis=-1, keepdims=True)
        p = jnp.exp(s)
        denom = jnp.sum(p, axis=-1, keepdims=True)
        p = p * pl.reciprocal(denom, approx=True)
        o = jnp.dot(p.astype(jnp.bfloat16), v,
                    preferred_element_type=jnp.float32)
        o_ref[0, 0] = o.astype(o_ref.dtype)
    return kernel


def pallas_attention(q, k, v, bias, scale):
    """q,k,v: [B, n_head, L, dh]; bias: [n_head, L, L] (indexed per head by the
       grid — never broadcast over batch).  Padded key columns are masked with
       a large negative bias value."""
    B, NH, L, D = q.shape
    Lp = _round_up(L, 8)
    Dp = _round_up(D, 128)
    # TODO(synk): for long sequences tile the KV axis flash-style (online softmax).
    qp = jnp.pad(q.astype(jnp.bfloat16), ((0, 0), (0, 0), (0, Lp - L), (0, Dp - D)))
    kp = jnp.pad(k.astype(jnp.bfloat16), ((0, 0), (0, 0), (0, Lp - L), (0, Dp - D)))
    vp = jnp.pad(v.astype(jnp.bfloat16), ((0, 0), (0, 0), (0, Lp - L), (0, Dp - D)))
    bp = jnp.pad(bias.astype(jnp.float32), ((0, 0), (0, Lp - L), (0, Lp - L)),
                 constant_values=-1e9)
    out = pl.pallas_call(
        _attn_kernel_factory(scale),
        grid=(B, NH),
        in_specs=[pl.BlockSpec((1, 1, Lp, Dp), lambda b, h: (b, h, 0, 0)),
                  pl.BlockSpec((1, 1, Lp, Dp), lambda b, h: (b, h, 0, 0)),
                  pl.BlockSpec((1, 1, Lp, Dp), lambda b, h: (b, h, 0, 0)),
                  pl.BlockSpec((1, Lp, Lp), lambda b, h: (h, 0, 0))],
        out_specs=pl.BlockSpec((1, 1, Lp, Dp), lambda b, h: (b, h, 0, 0)),
        out_shape=jax.ShapeDtypeStruct((B, NH, Lp, Dp), jnp.float32),
        compiler_params=pltpu.CompilerParams(
            dimension_semantics=("parallel", "parallel")),
    )(qp, kp, vp, bp)
    return out[:, :, :L, :D]


# ------------------------ tiled global average pool --------------------------

def _pool_kernel_factory(inv_hw):
    def kernel(x_ref, o_ref, acc_ref):
        @pl.when(pl.program_id(0) == 0)
        def _init():
            acc_ref[...] = jnp.zeros_like(acc_ref)

        acc_ref[...] += jnp.sum(x_ref[...], axis=1)

        @pl.when(pl.program_id(0) == pl.num_programs(0) - 1)
        def _fin():
            o_ref[...] = (acc_ref[...] * inv_hw).astype(o_ref.dtype)
    return kernel


def pallas_global_avg_pool(x):
    """x: [B, HW, C] -> mean over HW -> [B, C]; running-sum reduction over HW."""
    B, HW, C = x.shape
    thw = min(512, _round_up(HW, 8))
    HWp = _round_up(HW, thw)
    Cp = _round_up(C, 128)
    xp = jnp.pad(x.astype(jnp.float32), ((0, 0), (0, HWp - HW), (0, Cp - C)))
    out = pl.pallas_call(
        _pool_kernel_factory(1.0 / HW),
        grid=(HWp // thw,),
        in_specs=[pl.BlockSpec((B, thw, Cp), lambda i: (0, i, 0))],
        out_specs=pl.BlockSpec((B, Cp), lambda i: (0, 0)),
        out_shape=jax.ShapeDtypeStruct((B, Cp), jnp.float32),
        scratch_shapes=[pltpu.VMEM((B, Cp), jnp.float32)],
        compiler_params=pltpu.CompilerParams(dimension_semantics=("arbitrary",)),
    )(xp)
    return out[:, :C]


# ------------------------------ glue (plain JAX) ----------------------------

def im2col(x, stride):
    """x: [B,H,W,C] NHWC, kernel 3x3, padding 1 -> patches [B,Ho,Wo,9,C]."""
    B, H, W, C = x.shape
    Ho = (H + 2 - 3) // stride + 1
    Wo = (W + 2 - 3) // stride + 1
    xp = jnp.pad(x, ((0, 0), (1, 1), (1, 1), (0, 0)))
    cols = []
    for kh in range(3):
        for kw in range(3):
            cols.append(xp[:, kh:kh + stride * (Ho - 1) + 1:stride,
                            kw:kw + stride * (Wo - 1) + 1:stride, :])
    return jnp.stack(cols, axis=3), Ho, Wo


def maxpool2x2(x):
    B, H, W, C = x.shape
    return x.reshape(B, H // 2, 2, W // 2, 2, C).max(axis=(2, 4))


def conv3x3(x, w, b, stride, act='none'):
    """Stem 3x3 conv, padding=1, via im2col + tiled Pallas matmul."""
    # TODO(synk): at 224x224 resolutions replace im2col with an in-kernel
    # 9-tap K accumulation to avoid the 9x patch tensor in HBM.
    B, H, W, C = x.shape
    patches, Ho, Wo = im2col(x, stride)
    xm = patches.reshape(B * Ho * Wo, 9 * C)
    wm = w.reshape(9 * C, -1)
    y = pallas_matmul(xm, wm, b, act)
    return y.reshape(B, Ho, Wo, -1)


def relative_index(h, w):
    coords = np.stack(np.meshgrid(np.arange(h), np.arange(w),
                                  indexing='ij'), -1).reshape(-1, 2)
    rel = coords[:, None, :] - coords[None, :, :]
    rel[..., 0] += h - 1
    rel[..., 1] += w - 1
    return jnp.asarray(rel[..., 0] * (2 * w - 1) + rel[..., 1], jnp.int32)


# ------------------------------ parameters ----------------------------------

class ParamBank:
    def __init__(self, seed=0):
        self._key = jax.random.PRNGKey(seed)
        self._cnt = 0

    def normal(self, shape, scale):
        self._cnt += 1
        k = jax.random.fold_in(self._key, self._cnt)
        return jax.random.normal(k, shape, jnp.float32) * scale


CONFIGS = {
    # small synthetic config (same C-C-T-T structure as coatnet-0, scaled down).
    'coatnet-tiny': {'num_blocks': [2, 1, 1, 1, 1],
                     'num_channels': [8, 16, 32, 64, 64],
                     'expand_ratio': [2, 2, 2, 2, 2],
                     'n_head': 4,
                     'block_types': ['C', 'C', 'T', 'T']},
}

_BN_SCALE = 1.0 / math.sqrt(1.0 + 1e-5)   # eval-mode BN with default stats


def init_mbconv(pg, cin, cout, expand):
    cmid = cin * expand
    cse = max(1, cmid // 4)
    return {
        'bn_scale': jnp.full((cin,), _BN_SCALE, jnp.float32),
        'bn_shift': jnp.zeros((cin,), jnp.float32),
        'w_exp': pg.normal((cin, cmid), 1.0 / math.sqrt(cin)),
        'b_exp': pg.normal((cmid,), 0.01),
        'w_dw': pg.normal((9, cmid), 1.0 / 3.0),
        'b_dw': pg.normal((cmid,), 0.01),
        'w_se1': pg.normal((cmid, cse), 1.0 / math.sqrt(cmid)),
        'b_se1': pg.normal((cse,), 0.01),
        'w_se2': pg.normal((cse, cmid), 1.0 / math.sqrt(cse)),
        'b_se2': pg.normal((cmid,), 0.01),
        'w_proj': pg.normal((cmid, cout), 1.0 / math.sqrt(cmid)),
        'b_proj': pg.normal((cout,), 0.01),
        'w_sc': pg.normal((cin, cout), 1.0 / math.sqrt(cin)),
        'b_sc': pg.normal((cout,), 0.01),
        'cin': cin, 'cout': cout, 'cmid': cmid,
    }


def init_transformer(pg, cin, cout, expand, n_head, oh, ow):
    dh = cout // n_head
    return {
        'ln1_g': jnp.ones((cin,), jnp.float32),
        'ln1_b': jnp.zeros((cin,), jnp.float32),
        'wq': pg.normal((cin, cout), 1.0 / math.sqrt(cin)),
        'bq': pg.normal((cout,), 0.01),
        'wk': pg.normal((cin, cout), 1.0 / math.sqrt(cin)),
        'bk': pg.normal((cout,), 0.01),
        'wv': pg.normal((cin, cout), 1.0 / math.sqrt(cin)),
        'bv': pg.normal((cout,), 0.01),
        'wo': pg.normal((cout, cout), 1.0 / math.sqrt(cout)),
        'bo': pg.normal((cout,), 0.01),
        'rel_table': pg.normal(((2 * oh - 1) * (2 * ow - 1), n_head), 0.02),
        'rel_index': relative_index(oh, ow),
        'ln2_g': jnp.ones((cout,), jnp.float32),
        'ln2_b': jnp.zeros((cout,), jnp.float32),
        'w_ff1': pg.normal((cout, cout * expand), 1.0 / math.sqrt(cout)),
        'b_ff1': pg.normal((cout * expand,), 0.01),
        'w_ff2': pg.normal((cout * expand, cout), 1.0 / math.sqrt(cout * expand)),
        'b_ff2': pg.normal((cout,), 0.01),
        'w_sc': pg.normal((cin, cout), 1.0 / math.sqrt(cin)),
        'b_sc': pg.normal((cout,), 0.01),
        'n_head': n_head, 'dh': dh, 'cin': cin, 'cout': cout,
    }


def init_coatnet(inp_h, inp_w, in_channels, config='coatnet-tiny', seed=0):
    cfg = CONFIGS[config]
    pg = ParamBank(seed)
    c0 = cfg['num_channels'][0]

    stem = []
    cin = in_channels
    for i in range(cfg['num_blocks'][0]):
        stem.append({'w': pg.normal((3, 3, cin, c0), 1.0 / math.sqrt(9 * cin)),
                     'b': pg.normal((c0,), 0.01),
                     'stride': 2 if i == 0 else 1})
        cin = c0

    stage_specs = [
        (cfg['num_channels'][0], cfg['num_channels'][1], cfg['num_blocks'][1],
         cfg['expand_ratio'][0], cfg['block_types'][0], inp_h >> 2, inp_w >> 2),
        (cfg['num_channels'][1], cfg['num_channels'][2], cfg['num_blocks'][2],
         cfg['expand_ratio'][1], cfg['block_types'][1], inp_h >> 3, inp_w >> 3),
        (cfg['num_channels'][2], cfg['num_channels'][3], cfg['num_blocks'][3],
         cfg['expand_ratio'][2], cfg['block_types'][2], inp_h >> 4, inp_w >> 4),
        (cfg['num_channels'][3], cfg['num_channels'][4], cfg['num_blocks'][4],
         cfg['expand_ratio'][3], cfg['block_types'][3], inp_h >> 5, inp_w >> 5),
    ]
    stages = []
    for cin_s, cout_s, depth, exp, btype, oh, ow in stage_specs:
        blocks = []
        for i in range(depth):
            bc_in = cin_s if i == 0 else cout_s
            if btype == 'C':
                blocks.append(('C', init_mbconv(pg, bc_in, cout_s, exp)))
            else:
                blocks.append(('T', init_transformer(pg, bc_in, cout_s, exp,
                                                     cfg['n_head'], oh, ow)))
        stages.append(blocks)
    return {'stem': stem, 'stages': stages}, cfg


# ------------------------------ block forwards ------------------------------

def mbconv_forward(x, p, downsample):
    B, H, W, cin = x.shape
    cmid, cout = p['cmid'], p['cout']
    # eval-mode BN folded into the 1x1 expand matmul (exact algebra):
    w_exp = p['bn_scale'][:, None] * p['w_exp']
    b_exp = p['b_exp'] + p['bn_shift'] @ p['w_exp']
    h = pallas_matmul(x.reshape(B * H * W, cin), w_exp, b_exp, act='gelu')
    h = h.reshape(B, H, W, cmid)
    # depthwise 3x3 + GELU (in-kernel taps); stride-2 via subsample
    h = pallas_dwconv3x3(h, p['w_dw'], p['b_dw'], act='gelu')
    if downsample:
        h = h[:, ::2, ::2, :]
    Ho, Wo = h.shape[1], h.shape[2]
    hb = h.reshape(B, Ho * Wo, cmid)
    # squeeze-and-excitation
    s = pallas_global_avg_pool(hb)                                  # [B, cmid]
    s = pallas_matmul(s, p['w_se1'], p['b_se1'], act='silu')
    s = pallas_matmul(s, p['w_se2'], p['b_se2'], act='sigmoid')
    # SE scale fused into the 1x1 projection matmul
    h = pallas_se_proj(hb, s, p['w_proj'], p['b_proj'])             # [B, HW, cout]
    h = h.reshape(B, Ho, Wo, cout)
    # shortcut (pool + 1x1 proj on the downsampling block)
    if downsample:
        sc = maxpool2x2(x)
        sc = pallas_matmul(sc.reshape(B * Ho * Wo, cin), p['w_sc'], p['b_sc'])
        sc = sc.reshape(B, Ho, Wo, cout)
    else:
        sc = x   # config guarantees cin == cout for non-downsample blocks
    return sc + h


def transformer_forward(x, p, downsample):
    B, H, W, cin = x.shape
    n_head, dh, cout = p['n_head'], p['dh'], p['cout']
    xm = maxpool2x2(x) if downsample else x
    Ho, Wo = xm.shape[1], xm.shape[2]
    L = Ho * Wo
    tok = xm.reshape(B, L, cin)
    if downsample:
        sc = pallas_matmul(tok.reshape(B * L, cin), p['w_sc'], p['b_sc'])
        sc = sc.reshape(B, L, cout)
    else:
        sc = tok
    # fused pre-LN + QKV projection (Wq|Wk|Wv concatenated -> lane-dense N)
    wqkv = jnp.concatenate([p['wq'], p['wk'], p['wv']], axis=1)
    bqkv = jnp.concatenate([p['bq'], p['bk'], p['bv']], axis=0)
    qkv = pallas_ln_matmul(tok.reshape(B * L, cin), p['ln1_g'], p['ln1_b'],
                           wqkv, bqkv)                               # [B*L, 3*cout]
    qkv = qkv.reshape(B, L, 3, n_head, dh).transpose(2, 0, 3, 1, 4)  # [3,B,nh,L,dh]
    q, k, v = qkv[0], qkv[1], qkv[2]
    # relative position bias, indexed per head inside the kernel (no B broadcast)
    bias = p['rel_table'][p['rel_index']]            # [L, L, n_head] (gather: glue)
    bias = jnp.transpose(bias, (2, 0, 1))            # [n_head, L, L]
    attn = pallas_attention(q, k, v, bias, 1.0 / math.sqrt(dh))      # [B,nh,L,dh]
    attn = attn.transpose(0, 2, 1, 3).reshape(B * L, cout)
    attn = pallas_matmul(attn, p['wo'], p['bo'])
    x1 = sc + attn.reshape(B, L, cout)
    # FFN: pre-LN fused into fc1 (GELU), then fc2
    h2 = pallas_ln_matmul(x1.reshape(B * L, cout), p['ln2_g'], p['ln2_b'],
                          p['w_ff1'], p['b_ff1'], act='gelu')
    h2 = pallas_matmul(h2, p['w_ff2'], p['b_ff2'])
    x2 = x1 + h2.reshape(B, L, cout)
    return x2.reshape(B, Ho, Wo, cout)


# ------------------------------ full forward --------------------------------

def coatnet_forward(x_nchw, params):
    x = jnp.transpose(x_nchw, (0, 2, 3, 1))    # NCHW -> NHWC
    # s0: stem of 3x3 convs (first one stride 2)
    for blk in params['stem']:
        x = conv3x3(x, blk['w'], blk['b'], blk['stride'])
    # s1..s4
    for blocks in params['stages']:
        for i, (btype, bp) in enumerate(blocks):
            downsample = (i == 0)
            if btype == 'C':
                x = mbconv_forward(x, bp, downsample)
            else:
                x = transformer_forward(x, bp, downsample)
    # adaptive_avg_pool2d(x, 1).view(B, -1)
    B, H, W, C = x.shape
    return pallas_global_avg_pool(x.reshape(B, H * W, C))


# ---------------------------------- main -------------------------------------

if __name__ == "__main__":
    B, C_in, H, W = 2, 3, 32, 32
    x = jax.random.normal(jax.random.PRNGKey(0), (B, C_in, H, W), jnp.float32)  # NCHW
    params, cfg = init_coatnet(H, W, C_in, config='coatnet-tiny', seed=0)
    out = coatnet_forward(x, params)
    out = jax.block_until_ready(out)
    assert out.shape == (B, cfg['num_channels'][-1]), out.shape
    assert bool(jnp.all(jnp.isfinite(out)))
    print("KERNEL_OK")
</pallas_src>

<mosaic_0001>
module attributes {stable_mosaic.version = 11 : i64} {
  func.func @kernel(%arg0: i32, %arg1: i32, %arg2: i32, %arg3: memref<256x128xbf16, #tpu.memory_space<vmem>>, %arg4: memref<128x128xbf16, #tpu.memory_space<vmem>>, %arg5: memref<1x128xf32, #tpu.memory_space<vmem>>, %arg6: memref<256x128xf32, #tpu.memory_space<vmem>>, %arg7: memref<256x128xf32, #tpu.memory_space<vmem>>) attributes {dimension_semantics = [#tpu.dimension_semantics<parallel>, #tpu.dimension_semantics<parallel>, #tpu.dimension_semantics<arbitrary>], iteration_bounds = array<i64: 2, 1, 1>, scalar_prefetch = 0 : i64, scratch_operands = 1 : i64, tpu.core_type = #tpu.core_type<tc>, window_params = [{transform_indices = @transform_0, window_bounds = array<i64: 256, 128>}, {transform_indices = @transform_1, window_bounds = array<i64: 128, 128>}, {transform_indices = @transform_2, window_bounds = array<i64: 1, 128>}, {transform_indices = @transform_3, window_bounds = array<i64: 256, 128>}]} {
    %c0_i32 = arith.constant 0 : i32
    %0 = arith.cmpi eq, %arg2, %c0_i32 : i32
    %1 = arith.extui %0 : i1 to i32
    %c0_i32_0 = arith.constant 0 : i32
    %2 = arith.cmpi ne, %1, %c0_i32_0 : i32
    scf.if %2 {
      %cst_10 = arith.constant 0.000000e+00 : f32
      %12 = vector.broadcast %cst_10 : f32 to vector<256x128xf32>
      %c0_11 = arith.constant 0 : index
      %c0_12 = arith.constant 0 : index
      %13 = vector.load %arg7[%c0_11, %c0_12] : memref<256x128xf32, #tpu.memory_space<vmem>>, vector<256x128xf32>
      tpu.vector_store %arg7[%c0_11, %c0_12], %12 {strides = array<i32>} : memref<256x128xf32, #tpu.memory_space<vmem>>, vector<256x128xf32>,
    } else {
    }
    %c0 = arith.constant 0 : index
    %c0_1 = arith.constant 0 : index
    %3 = vector.load %arg7[%c0, %c0_1] : memref<256x128xf32, #tpu.memory_space<vmem>>, vector<256x128xf32>
    %c0_2 = arith.constant 0 : index
    %c0_3 = arith.constant 0 : index
    %4 = vector.load %arg3[%c0_2, %c0_3] : memref<256x128xbf16, #tpu.memory_space<vmem>>, vector<256x128xbf16>
    %c0_4 = arith.constant 0 : index
    %c0_5 = arith.constant 0 : index
    %5 = vector.load %arg4[%c0_4, %c0_5] : memref<128x128xbf16, #tpu.memory_space<vmem>>, vector<128x128xbf16>
    %cst = arith.constant dense<0.000000e+00> : vector<256x128xf32>
    %6 = tpu.matmul %4, %5, %cst {dimension_numbers = #tpu.dot_dimension_numbers<[1], [0], [0], [1], [0, 0, 1, 1], [], []>} : vector<256x128xbf16>, vector<128x128xbf16>, vector<256x128xf32> -> vector<256x128xf32>
    %7 = arith.addf %3, %6 : vector<256x128xf32>
    %c0_6 = arith.constant 0 : index
    %c0_7 = arith.constant 0 : index
    %8 = vector.load %arg7[%c0_6, %c0_7] : memref<256x128xf32, #tpu.memory_space<vmem>>, vector<256x128xf32>
    tpu.vector_store %arg7[%c0_6, %c0_7], %7 {strides = array<i32>} : memref<256x128xf32, #tpu.memory_space<vmem>>, vector<256x128xf32>,
    %c0_i32_8 = arith.constant 0 : i32
    %9 = arith.cmpi eq, %arg2, %c0_i32_8 : i32
    %10 = arith.extui %9 : i1 to i32
    %c0_i32_9 = arith.constant 0 : i32
    %11 = arith.cmpi ne, %10, %c0_i32_9 : i32
    scf.if %11 {
      %c0_10 = arith.constant 0 : index
      %c0_11 = arith.constant 0 : index
      %12 = vector.load %arg7[%c0_10, %c0_11] : memref<256x128xf32, #tpu.memory_space<vmem>>, vector<256x128xf32>
      %c0_12 = arith.constant 0 : index
      %c0_13 = arith.constant 0 : index
      %13 = vector.load %arg5[%c0_12, %c0_13] : memref<1x128xf32, #tpu.memory_space<vmem>>, vector<1x128xf32>
      %14 = vector.broadcast %13 : vector<1x128xf32> to vector<256x128xf32>
      %15 = arith.addf %12, %14 : vector<256x128xf32>
      %c0_14 = arith.constant 0 : index
      %c0_15 = arith.constant 0 : index
      %16 = vector.load %arg6[%c0_14, %c0_15] : memref<256x128xf32, #tpu.memory_space<vmem>>, vector<256x128xf32>
      tpu.vector_store %arg6[%c0_14, %c0_15], %15 {strides = array<i32>} : memref<256x128xf32, #tpu.memory_space<vmem>>, vector<256x128xf32>,
    } else {
    }
    return
  }
  func.func @transform_0(%arg0: i32, %arg1: i32, %arg2: i32) -> (i32, i32) {
    %c0_i32 = arith.constant 0 : i32
    return %arg0, %arg2 : i32, i32
  }
  func.func @transform_1(%arg0: i32, %arg1: i32, %arg2: i32) -> (i32, i32) {
    %c0_i32 = arith.constant 0 : i32
    return %arg2, %arg1 : i32, i32
  }
  func.func @transform_2(%arg0: i32, %arg1: i32, %arg2: i32) -> (i32, i32) {
    %c0_i32 = arith.constant 0 : i32
    %c0_i32_0 = arith.constant 0 : i32
    return %c0_i32, %arg1 : i32, i32
  }
  func.func @transform_3(%arg0: i32, %arg1: i32, %arg2: i32) -> (i32, i32) {
    %c0_i32 = arith.constant 0 : i32
    return %arg0, %arg1 : i32, i32
  }
}

</mosaic_0001>

<llo_original>
// kernel: tpu_custom_call.1
$region0: #{tpu_custom_call.1}
  #allocation0 [shape = 'u32[]', space=smem, size = 0x4, offset = 0x4, fixed_abs, tag = 'smem constant byte address 0x4 - core index']
  #allocation1 [shape = 'u32[72,128]{1,0:T(1,128)}', space=vmem, size = 0x9000, scoped, tag = 'internal scratch']
  #allocation2 [shape = 'f32[256,128]{1,0:T(8,128)}', space=vmem, size = 0x20000, scoped, tag = 'scratch operand']
  %s0 = inlined_call_operand.hbm [shape: bf16[512,128], index: 0, kind: input, shape index: {}]
  %s1 = inlined_call_operand.hbm [shape: bf16[128,128], index: 1, kind: input, shape index: {}]
  %s2 = inlined_call_operand.vmem [shape: f32[1,128], index: 2, kind: input, shape index: {}]
  %s3 = inlined_call_operand.hbm [shape: f32[512,128], index: 3, kind: output, shape index: {}]
  %s4 = sld [smem:[#allocation0]]
  $region61: #{tpu_custom_call.1} parent=0
    _
  %s6 = ssub.s32 1, %s4
  %s7 = scalar_select 0, %s6, %s4
  $region1: #{tpu_custom_call.1} parent=0
    #allocation3 [shape = 'u8[131072]{0}', space=vmem, size = 0x20000, scoped, tag = 'input window, operand 0']
    #allocation4 [shape = 's32[2]{0}', space=sflag, size = 0x8, scoped, tag = 'scoped memory for tpu_custom_call.1']
    #allocation5 [shape = 's32[2]{0}', space=sflag, size = 0x8, scoped, tag = 'scoped memory for tpu_custom_call.1']
    #allocation6 [shape = 'u8[32768]{0}', space=vmem, size = 0x8000, scoped, tag = 'input window, operand 1, single buffered']
    #allocation7 [shape = 's32[1]{0}', space=sflag, size = 0x4, scoped, tag = 'scoped memory for tpu_custom_call.1']
    #allocation8 [shape = 'u8[262144]{0}', space=vmem, size = 0x40000, scoped, tag = 'output window, operand 0']
    %8 = vsyncpa [#allocation4], 0
    %s9 = scalar_lea.sflag [#allocation4], 1
    %10 = vsyncpa %s9, 0
    %11 = vsyncpa [#allocation7], 0
    %12 = vsyncpa [#allocation5], 0
    %s13 = scalar_lea.sflag [#allocation5], 1
    %14 = vsyncpa %s13, 0
    loop: start=0, step=1, limit=4
    $region2: #{tpu_custom_call.1} parent=1 // loop_pre_header
      _
    $region3: #{tpu_custom_call.1} parent=1 // loop_header
      %s16 = sphi 0, %s20
      %p17 = scmp.ge.s32.totalorder %s16, 4
      %s23 = sphi 0, %s42
      %s24 = sphi 0, %s38
      %s25 = sphi 0, %s34
      %s26 = sphi 0, %s23
      %s27 = sphi 0, %s24
      %s28 = sphi 0, %s25
      %s29 = sphi 0, %s26
      %s30 = sphi 0, %s27
      %s31 = sphi 0, %s28
      %s47 = sphi 0, %s49
      %s50 = sphi 0, %s47
      %s51 = sphi 0, %s50
      %s67 = sphi 0, %s51
      %s75 = sphi 0, %s77
      %s78 = sphi 0, %s75
      %s79 = sphi 0, %s78
      %s95 = sphi 0, %s79
      %s101 = sphi 0, %s103
      %s104 = sphi 0, %s101
      %s105 = sphi 0, %s104
      %s121 = sphi 0, %s105
      %s129 = sphi 0, %s131
      %s132 = sphi 0, %s129
      %s133 = sphi 0, %s132
      %s149 = sphi 0, %s133
    $region4: #{tpu_custom_call.1} parent=1 // loop_header_branch
      %19 = sbr.rel (%p17) target = $region8
    $region5: #{tpu_custom_call.1} parent=1 // loop_body
      %s21 = ssub.s32 %s16, 1
      %s22 = ssub.s32 %s16, 2
      %s32 = sadd.s32 1, %s25
      %p33 = scmp.ge.s32.totalorder %s32, 1
      %s34 = scalar_select %p33, 0, %s32
      %s35 = sadd.s32 1, %s24
      %s36 = scalar_select %p33, %s35, %s24
      %p37 = scmp.ge.s32.totalorder %s36, 1
      %s38 = scalar_select %p37, 0, %s36
      %s39 = sadd.s32 1, %s23
      %s40 = scalar_select %p37, %s39, %s23
      %p41 = scmp.ge.s32.totalorder %s40, 2
      %s42 = scalar_select %p41, 0, %s40
      %s43 = ssub.s32 %s23, %s42
      %s44 = ssub.s32 %s25, %s34
      %s45 = sor.u32 %s43, %s44
      %p46 = scmp.eq.s32.totalorder %s45, 0
      %s48 = sadd.s32 %s47, 1
      %s49 = scalar_select %p46, %s47, %s48
      %p52 = pneg %p46
      %p53 = scmp.eq.s32.totalorder %s16, 1
      %p54 = por %p52, %p53
      %p55 = scmp.ne.s32.totalorder %s47, %s50
      %p56 = scmp.eq.s32.totalorder %s16, 0
      %p57 = por %p55, %p56
      %p58 = scmp.ne.s32.totalorder %s47, %s50
      %p59 = scmp.eq.s32.totalorder %s21, 1
      %p60 = por %p58, %p59
      %p61 = scmp.ne.s32.totalorder %s50, %s51
      %p62 = scmp.eq.s32.totalorder %s21, 0
      %p63 = por %p61, %p62
      %p64 = scmp.ne.s32.totalorder %s50, %s51
      %p65 = scmp.eq.s32.totalorder %s22, 1
      %p66 = por %p64, %p65
      %p68 = scmp.ne.s32.totalorder %s51, %s67
      %p69 = scmp.eq.s32.totalorder %s22, 0
      %p70 = por %p68, %p69
      %s71 = ssub.s32 %s25, %s34
      %s72 = ssub.s32 %s24, %s38
      %s73 = sor.u32 %s71, %s72
      %p74 = scmp.eq.s32.totalorder %s73, 0
      %s76 = sadd.s32 %s75, 1
      %s77 = scalar_select %p74, %s75, %s76
      %p80 = pneg %p74
      %p81 = scmp.eq.s32.totalorder %s16, 1
      %p82 = por %p80, %p81
      %p83 = scmp.ne.s32.totalorder %s75, %s78
      %p84 = scmp.eq.s32.totalorder %s16, 0
      %p85 = por %p83, %p84
      %p86 = scmp.ne.s32.totalorder %s75, %s78
      %p87 = scmp.eq.s32.totalorder %s21, 1
      %p88 = por %p86, %p87
      %p89 = scmp.ne.s32.totalorder %s78, %s79
      %p90 = scmp.eq.s32.totalorder %s21, 0
      %p91 = por %p89, %p90
      %p92 = scmp.ne.s32.totalorder %s78, %s79
      %p93 = scmp.eq.s32.totalorder %s22, 1
      %p94 = por %p92, %p93
      %p96 = scmp.ne.s32.totalorder %s79, %s95
      %p97 = scmp.eq.s32.totalorder %s22, 0
      %p98 = por %p96, %p97
      %s99 = ssub.s32 %s24, %s38
      %p100 = scmp.eq.s32.totalorder %s99, 0
      %s102 = sadd.s32 %s101, 1
      %s103 = scalar_select %p100, %s101, %s102
      %p106 = pneg %p100
      %p107 = scmp.eq.s32.totalorder %s16, 1
      %p108 = por %p106, %p107
      %p109 = scmp.ne.s32.totalorder %s101, %s104
      %p110 = scmp.eq.s32.totalorder %s16, 0
      %p111 = por %p109, %p110
      %p112 = scmp.ne.s32.totalorder %s101, %s104
      %p113 = scmp.eq.s32.totalorder %s21, 1
      %p114 = por %p112, %p113
      %p115 = scmp.ne.s32.totalorder %s104, %s105
      %p116 = scmp.eq.s32.totalorder %s21, 0
      %p117 = por %p115, %p116
      %p118 = scmp.ne.s32.totalorder %s104, %s105
      %p119 = scmp.eq.s32.totalorder %s22, 1
      %p120 = por %p118, %p119
      %p122 = scmp.ne.s32.totalorder %s105, %s121
      %p123 = scmp.eq.s32.totalorder %s22, 0
      %p124 = por %p122, %p123
      %s125 = ssub.s32 %s23, %s42
      %s126 = ssub.s32 %s24, %s38
      %s127 = sor.u32 %s125, %s126
      %p128 = scmp.eq.s32.totalorder %s127, 0
      %s130 = sadd.s32 %s129, 1
      %s131 = scalar_select %p128, %s129, %s130
      %p134 = pneg %p128
      %p135 = scmp.eq.s32.totalorder %s16, 1
      %p136 = por %p134, %p135
      %p137 = scmp.ne.s32.totalorder %s129, %s132
      %p138 = scmp.eq.s32.totalorder %s16, 0
      %p139 = por %p137, %p138
      %p140 = scmp.ne.s32.totalorder %s129, %s132
      %p141 = scmp.eq.s32.totalorder %s21, 1
      %p142 = por %p140, %p141
      %p143 = scmp.ne.s32.totalorder %s132, %s133
      %p144 = scmp.eq.s32.totalorder %s21, 0
      %p145 = por %p143, %p144
      %p146 = scmp.ne.s32.totalorder %s132, %s133
      %p147 = scmp.eq.s32.totalorder %s22, 1
      %p148 = por %p146, %p147
      %p150 = scmp.ne.s32.totalorder %s133, %s149
      %p151 = scmp.eq.s32.totalorder %s22, 0
      %p152 = por %p150, %p151
      %p153 = scmp.le.s32.totalorder 1, %s16
      %p154 = scmp.lt.s32.totalorder %s16, 3
      %p155 = pnand %p153, %p154
      %p156 = pneg %p155
      // Predicated region
      $region9: #{tpu_custom_call.1} parent=5 // pred_check
        _
      $region10: #{tpu_custom_call.1} parent=5 // pred_check_branch
        %158 = sbr.rel (%p155) target = $region12
      $region11: #{tpu_custom_call.1} parent=5 // pred_region
        %s159 = ssub.s32 %s16, 1
        // Predicated region
        $region13: #{tpu_custom_call.1} parent=11 // pred_check
          %p160 = pneg %p91
        $region14: #{tpu_custom_call.1} parent=11 // pred_check_branch
          %162 = sbr.rel (%p160) target = $region16
        $region15: #{tpu_custom_call.1} parent=11 // pred_region
          %s163 = smul.u32 16, %s28
          %165 = vsyncadd [#allocation7], 0
          %s166 = sadd.s32 %s27, %s163
          %s167 = smul.addr %s166, 4
          %s168 = scalar_lea.hbm %s1, %s167
          %s169 = sshll.u32 %s168, 4
          %s170 = int_to_ptr.hbm [resolvable:$true] %s169
          %s171 = sshll.u32 [#allocation6], 4
          %s172 = int_to_ptr.vmem [resolvable:$true] %s171
          %177 = dma.hbm_to_vmem [thread:$0]  %s170, 1024, %s172, [#allocation7], 64, 64, 4
        $region16: #{tpu_custom_call.1} parent=11 // pred_fallthru
          _
        // Predicated region
        $region17: #{tpu_custom_call.1} parent=11 // pred_check
          %p178 = pneg %p117
        $region18: #{tpu_custom_call.1} parent=11 // pred_check_branch
          %180 = sbr.rel (%p178) target = $region20
        $region19: #{tpu_custom_call.1} parent=11 // pred_region
          %p181 = scmp.lt.s32.totalorder %s27, 0
          %s182 = scalar_select %p181, %s27, 0
          %s183 = scalar_lea.vmem %s2, %s182
        $region20: #{tpu_custom_call.1} parent=11 // pred_fallthru
          _
      $region12: #{tpu_custom_call.1} parent=5 // pred_fallthru
        _
      %p184 = scmp.lt.s32.totalorder %s16, 2
      // Predicated region
      $region21: #{tpu_custom_call.1} parent=5 // pred_check
        %p185 = pneg %p184
      $region22: #{tpu_custom_call.1} parent=5 // pred_check_branch
        %187 = sbr.rel (%p185) target = $region24
      $region23: #{tpu_custom_call.1} parent=5 // pred_region
        // Predicated region
        $region25: #{tpu_custom_call.1} parent=23 // pred_check
          %p188 = pneg %p57
        $region26: #{tpu_custom_call.1} parent=23 // pred_check_branch
          %190 = sbr.rel (%p188) target = $region28
        $region27: #{tpu_custom_call.1} parent=23 // pred_region
          %s191 = sand.u32 %s47, 1
          %s192 = scalar_lea.sflag [#allocation4], %s191
          %s193 = sand.u32 %s47, 1
          %s194 = smul.addr %s193, 128
          %s195 = scalar_lea.vmem [#allocation3], %s194
          %s196 = smul.u32 32, %s23
          %198 = vsyncadd %s192, 0
          %s199 = sadd.s32 %s25, %s196
          %s200 = smul.addr %s199, 4
          %s201 = scalar_lea.hbm %s0, %s200
          %s202 = sshll.u32 %s201, 4
          %s203 = int_to_ptr.hbm [resolvable:$true] %s202
          %s204 = sshll.u32 %s195, 4
          %s205 = int_to_ptr.vmem [resolvable:$true] %s204
          %210 = dma.hbm_to_vmem [thread:$0]  %s203, 2048, %s205, %s192, 64, 64, 4
        $region28: #{tpu_custom_call.1} parent=23 // pred_fallthru
          _
      $region24: #{tpu_custom_call.1} parent=5 // pred_fallthru
        _
      %p211 = scmp.le.s32.totalorder 1, %s16
      %p212 = scmp.lt.s32.totalorder %s16, 3
      %p213 = pnand %p211, %p212
      %p214 = pneg %p213
      // Predicated region
      $region29: #{tpu_custom_call.1} parent=5 // pred_check
        _
      $region30: #{tpu_custom_call.1} parent=5 // pred_check_branch
        %216 = sbr.rel (%p213) target = $region32
      $region31: #{tpu_custom_call.1} parent=5 // pred_region
        %s217 = ssub.s32 %s16, 1
        %s218 = sand.u32 %s50, 1
        %s219 = scalar_lea.sflag [#allocation4], %s218
        %s220 = sand.u32 %s50, 1
        %s221 = smul.addr %s220, 128
        %s222 = scalar_lea.vmem [#allocation3], %s221
        // Predicated region
        $region33: #{tpu_custom_call.1} parent=31 // pred_check
          %p223 = pneg %p63
        $region34: #{tpu_custom_call.1} parent=31 // pred_check_branch
          %225 = sbr.rel (%p223) target = $region36
        $region35: #{tpu_custom_call.1} parent=31 // pred_region
          %227 = dma.done %s219, 2048
        $region36: #{tpu_custom_call.1} parent=31 // pred_fallthru
          _
        // Predicated region
        $region37: #{tpu_custom_call.1} parent=31 // pred_check
          %p228 = pneg %p91
        $region38: #{tpu_custom_call.1} parent=31 // pred_check_branch
          %230 = sbr.rel (%p228) target = $region40
        $region39: #{tpu_custom_call.1} parent=31 // pred_region
          %232 = dma.done [#allocation7], 1024
        $region40: #{tpu_custom_call.1} parent=31 // pred_fallthru
          _
        %s233 = sand.u32 %s50, 1
        %s234 = scalar_lea.sflag [#allocation4], %s233
        %s235 = sand.u32 %s50, 1
        %s236 = smul.addr %s235, 128
        %s237 = scalar_lea.vmem [#allocation3], %s236
        %p238 = pneg %p63
        %p239 = pneg %p60
        %p240 = pneg %p91
        %p241 = pneg %p88
        %p242 = scmp.lt.s32.totalorder %s27, 0
        %s243 = scalar_select %p242, %s27, 0
        %s244 = scalar_lea.vmem %s2, %s243
        %p245 = pneg %p117
        %p246 = pneg %p114
        %p247 = pneg %p145
        %p248 = pneg %p142
        %s249 = sand.u32 %s132, 1
        %s250 = scalar_lea.sflag [#allocation5], %s249
        %s251 = sand.u32 %s132, 1
        %s252 = smul.addr %s251, 256
        %s253 = scalar_lea.vmem [#allocation8], %s252
        %s254 = smul.u32 32, %s26
        %s255 = smul.u32 16, %s28
        %p256 = scmp.lt.s32.totalorder %s27, 0
        %s257 = scalar_select %p256, %s27, 0
        %s258 = scalar_lea.vmem %s2, %s257
        %s259 = smul.u32 32, %s26
        %p260 = scmp.eq.s32.totalorder %s28, 0
        // Predicated region
        $region41: #{tpu_custom_call.1} parent=31 // pred_check
          %p261 = pneg %p260
        $region42: #{tpu_custom_call.1} parent=31 // pred_check_branch
          %263 = sbr.rel (%p261) target = $region44
        $region43: #{tpu_custom_call.1} parent=31 // pred_region
          %264 = vst [vmem:[#allocation2] sm:$0xff] 0.0
          %265 = vst [vmem:[#allocation2 + $0x8] sm:$0xff] 0.0
          %266 = vst [vmem:[#allocation2 + $0x10] sm:$0xff] 0.0
          %267 = vst [vmem:[#allocation2 + $0x18] sm:$0xff] 0.0
          %268 = vst [vmem:[#allocation2 + $0x20] sm:$0xff] 0.0
          %269 = vst [vmem:[#allocation2 + $0x28] sm:$0xff] 0.0
          %270 = vst [vmem:[#allocation2 + $0x30] sm:$0xff] 0.0
          %271 = vst [vmem:[#allocation2 + $0x38] sm:$0xff] 0.0
          %272 = vst [vmem:[#allocation2 + $0x40] sm:$0xff] 0.0
          %273 = vst [vmem:[#allocation2 + $0x48] sm:$0xff] 0.0
          %274 = vst [vmem:[#allocation2 + $0x50] sm:$0xff] 0.0
          %275 = vst [vmem:[#allocation2 + $0x58] sm:$0xff] 0.0
          %276 = vst [vmem:[#allocation2 + $0x60] sm:$0xff] 0.0
          %277 = vst [vmem:[#allocation2 + $0x68] sm:$0xff] 0.0
          %278 = vst [vmem:[#allocation2 + $0x70] sm:$0xff] 0.0
          %279 = vst [vmem:[#allocation2 + $0x78] sm:$0xff] 0.0
          %280 = vst [vmem:[#allocation2 + $0x80] sm:$0xff] 0.0
          %281 = vst [vmem:[#allocation2 + $0x88] sm:$0xff] 0.0
          %282 = vst [vmem:[#allocation2 + $0x90] sm:$0xff] 0.0
          %283 = vst [vmem:[#allocation2 + $0x98] sm:$0xff] 0.0
          %284 = vst [vmem:[#allocation2 + $0xa0] sm:$0xff] 0.0
          %285 = vst [vmem:[#allocation2 + $0xa8] sm:$0xff] 0.0
          %286 = vst [vmem:[#allocation2 + $0xb0] sm:$0xff] 0.0
          %287 = vst [vmem:[#allocation2 + $0xb8] sm:$0xff] 0.0
          %288 = vst [vmem:[#allocation2 + $0xc0] sm:$0xff] 0.0
          %289 = vst [vmem:[#allocation2 + $0xc8] sm:$0xff] 0.0
          %290 = vst [vmem:[#allocation2 + $0xd0] sm:$0xff] 0.0
          %291 = vst [vmem:[#allocation2 + $0xd8] sm:$0xff] 0.0
          %292 = vst [vmem:[#allocation2 + $0xe0] sm:$0xff] 0.0
          %293 = vst [vmem:[#allocation2 + $0xe8] sm:$0xff] 0.0
          %294 = vst [vmem:[#allocation2 + $0xf0] sm:$0xff] 0.0
          %295 = vst [vmem:[#allocation2 + $0xf8] sm:$0xff] 0.0
        $region44: #{tpu_custom_call.1} parent=31 // pred_fallthru
          _
        %v296 = vld [vmem:[#allocation2] sm:$0xff]
        %v297 = vld [vmem:[#allocation2 + $0x8] sm:$0xff]
        %v298 = vld [vmem:[#allocation2 + $0x10] sm:$0xff]
        %v299 = vld [vmem:[#allocation2 + $0x18] sm:$0xff]
        %v300 = vld [vmem:[#allocation2 + $0x20] sm:$0xff]
        %v301 = vld [vmem:[#allocation2 + $0x28] sm:$0xff]
        %v302 = vld [vmem:[#allocation2 + $0x30] sm:$0xff]
        %v303 = vld [vmem:[#allocation2 + $0x38] sm:$0xff]
        %v304 = vld [vmem:[#allocation2 + $0x40] sm:$0xff]
        %v305 = vld [vmem:[#allocation2 + $0x48] sm:$0xff]
        %v306 = vld [vmem:[#allocation2 + $0x50] sm:$0xff]
        %v307 = vld [vmem:[#allocation2 + $0x58] sm:$0xff]
        %v308 = vld [vmem:[#allocation2 + $0x60] sm:$0xff]
        %v309 = vld [vmem:[#allocation2 + $0x68] sm:$0xff]
        %v310 = vld [vmem:[#allocation2 + $0x70] sm:$0xff]
        %v311 = vld [vmem:[#allocation2 + $0x78] sm:$0xff]
        %v312 = vld [vmem:[#allocation2 + $0x80] sm:$0xff]
        %v313 = vld [vmem:[#allocation2 + $0x88] sm:$0xff]
        %v314 = vld [vmem:[#allocation2 + $0x90] sm:$0xff]
        %v315 = vld [vmem:[#allocation2 + $0x98] sm:$0xff]
        %v316 = vld [vmem:[#allocation2 + $0xa0] sm:$0xff]
        %v317 = vld [vmem:[#allocation2 + $0xa8] sm:$0xff]
        %v318 = vld [vmem:[#allocation2 + $0xb0] sm:$0xff]
        %v319 = vld [vmem:[#allocation2 + $0xb8] sm:$0xff]
        %v320 = vld [vmem:[#allocation2 + $0xc0] sm:$0xff]
        %v321 = vld [vmem:[#allocation2 + $0xc8] sm:$0xff]
        %v322 = vld [vmem:[#allocation2 + $0xd0] sm:$0xff]
        %v323 = vld [vmem:[#allocation2 + $0xd8] sm:$0xff]
        %v324 = vld [vmem:[#allocation2 + $0xe0] sm:$0xff]
        %v325 = vld [vmem:[#allocation2 + $0xe8] sm:$0xff]
        %v326 = vld [vmem:[#allocation2 + $0xf0] sm:$0xff]
        %v327 = vld [vmem:[#allocation2 + $0xf8] sm:$0xff]
        %v328 = vld [vmem:[%s222] sm:$0xf]
        %v329 = vld [vmem:[%s222 + $0x4] sm:$0xf]
        %v330 = vld [vmem:[%s222 + $0x8] sm:$0xf]
        %v331 = vld [vmem:[%s222 + $0xc] sm:$0xf]
        %v332 = vld [vmem:[%s222 + $0x10] sm:$0xf]
        %v333 = vld [vmem:[%s222 + $0x14] sm:$0xf]
        %v334 = vld [vmem:[%s222 + $0x18] sm:$0xf]
        %v335 = vld [vmem:[%s222 + $0x1c] sm:$0xf]
        %v336 = vld [vmem:[%s222 + $0x20] sm:$0xf]
        %v337 = vld [vmem:[%s222 + $0x24] sm:$0xf]
        %v338 = vld [vmem:[%s222 + $0x28] sm:$0xf]
        %v339 = vld [vmem:[%s222 + $0x2c] sm:$0xf]
        %v340 = vld [vmem:[%s222 + $0x30] sm:$0xf]
        %v341 = vld [vmem:[%s222 + $0x34] sm:$0xf]
        %v342 = vld [vmem:[%s222 + $0x38] sm:$0xf]
        %v343 = vld [vmem:[%s222 + $0x3c] sm:$0xf]
        %v344 = vld [vmem:[%s222 + $0x40] sm:$0xf]
        %v345 = vld [vmem:[%s222 + $0x44] sm:$0xf]
        %v346 = vld [vmem:[%s222 + $0x48] sm:$0xf]
        %v347 = vld [vmem:[%s222 + $0x4c] sm:$0xf]
        %v348 = vld [vmem:[%s222 + $0x50] sm:$0xf]
        %v349 = vld [vmem:[%s222 + $0x54] sm:$0xf]
        %v350 = vld [vmem:[%s222 + $0x58] sm:$0xf]
        %v351 = vld [vmem:[%s222 + $0x5c] sm:$0xf]
        %v352 = vld [vmem:[%s222 + $0x60] sm:$0xf]
        %v353 = vld [vmem:[%s222 + $0x64] sm:$0xf]
        %v354 = vld [vmem:[%s222 + $0x68] sm:$0xf]
        %v355 = vld [vmem:[%s222 + $0x6c] sm:$0xf]
        %v356 = vld [vmem:[%s222 + $0x70] sm:$0xf]
        %v357 = vld [vmem:[%s222 + $0x74] sm:$0xf]
        %v358 = vld [vmem:[%s222 + $0x78] sm:$0xf]
        %v359 = vld [vmem:[%s222 + $0x7c] sm:$0xf]
        %v360 = vld [vmem:[#allocation6] sm:$0xf]
        %v361 = vld [vmem:[#allocation6 + $0x4] sm:$0xf]
        %v362 = vld [vmem:[#allocation6 + $0x8] sm:$0xf]
        %v363 = vld [vmem:[#allocation6 + $0xc] sm:$0xf]
        %v364 = vld [vmem:[#allocation6 + $0x10] sm:$0xf]
        %v365 = vld [vmem:[#allocation6 + $0x14] sm:$0xf]
        %v366 = vld [vmem:[#allocation6 + $0x18] sm:$0xf]
        %v367 = vld [vmem:[#allocation6 + $0x1c] sm:$0xf]
        %v368 = vld [vmem:[#allocation6 + $0x20] sm:$0xf]
        %v369 = vld [vmem:[#allocation6 + $0x24] sm:$0xf]
        %v370 = vld [vmem:[#allocation6 + $0x28] sm:$0xf]
        %v371 = vld [vmem:[#allocation6 + $0x2c] sm:$0xf]
        %v372 = vld [vmem:[#allocation6 + $0x30] sm:$0xf]
        %v373 = vld [vmem:[#allocation6 + $0x34] sm:$0xf]
        %v374 = vld [vmem:[#allocation6 + $0x38] sm:$0xf]
        %v375 = vld [vmem:[#allocation6 + $0x3c] sm:$0xf]
        %v408 = vunpack.c.l.b16 %v328
        %v409 = vunpack.c.l.b16 %v329
        %v410 = vunpack.c.l.b16 %v330
        %v411 = vunpack.c.l.b16 %v331
        %v412 = vunpack.c.l.b16 %v332
        %v413 = vunpack.c.l.b16 %v333
        %v414 = vunpack.c.l.b16 %v334
        %v415 = vunpack.c.l.b16 %v335
        %v416 = vunpack.c.l.b16 %v336
        %v417 = vunpack.c.l.b16 %v337
        %v418 = vunpack.c.l.b16 %v338
        %v419 = vunpack.c.l.b16 %v339
        %v420 = vunpack.c.l.b16 %v340
        %v421 = vunpack.c.l.b16 %v341
        %v422 = vunpack.c.l.b16 %v342
        %v423 = vunpack.c.l.b16 %v343
        %v424 = vunpack.c.l.b16 %v344
        %v425 = vunpack.c.l.b16 %v345
        %v426 = vunpack.c.l.b16 %v346
        %v427 = vunpack.c.l.b16 %v347
        %v428 = vunpack.c.l.b16 %v348
        %v429 = vunpack.c.l.b16 %v349
        %v430 = vunpack.c.l.b16 %v350
        %v431 = vunpack.c.l.b16 %v351
        %v432 = vunpack.c.l.b16 %v352
        %v433 = vunpack.c.l.b16 %v353
        %v434 = vunpack.c.l.b16 %v354
        %v435 = vunpack.c.l.b16 %v355
        %v436 = vunpack.c.l.b16 %v356
        %v437 = vunpack.c.l.b16 %v357
        %v438 = vunpack.c.l.b16 %v358
        %v439 = vunpack.c.l.b16 %v359
        %v440 = vpack.c.b16 %v409, %v408
        %v441 = vpack.c.b16 %v411, %v410
        %v442 = vpack.c.b16 %v413, %v412
        %v443 = vpack.c.b16 %v415, %v414
        %v444 = vpack.c.b16 %v417, %v416
        %v445 = vpack.c.b16 %v419, %v418
        %v446 = vpack.c.b16 %v421, %v420
        %v447 = vpack.c.b16 %v423, %v422
        %v448 = vpack.c.b16 %v425, %v424
        %v449 = vpack.c.b16 %v427, %v426
        %v450 = vpack.c.b16 %v429, %v428
        %v451 = vpack.c.b16 %v431, %v430
        %v452 = vpack.c.b16 %v433, %v432
        %v453 = vpack.c.b16 %v435, %v434
        %v454 = vpack.c.b16 %v437, %v436
        %v455 = vpack.c.b16 %v439, %v438
        %v488 = vunpack.c.l.b16 %v360
        %v489 = vunpack.c.l.b16 %v361
        %v490 = vunpack.c.l.b16 %v362
        %v491 = vunpack.c.l.b16 %v363
        %v492 = vunpack.c.l.b16 %v364
        %v493 = vunpack.c.l.b16 %v365
        %v494 = vunpack.c.l.b16 %v366
        %v495 = vunpack.c.l.b16 %v367
        %v496 = vunpack.c.l.b16 %v368
        %v497 = vunpack.c.l.b16 %v369
        %v498 = vunpack.c.l.b16 %v370
        %v499 = vunpack.c.l.b16 %v371
        %v500 = vunpack.c.l.b16 %v372
        %v501 = vunpack.c.l.b16 %v373
        %v502 = vunpack.c.l.b16 %v374
        %v503 = vunpack.c.l.b16 %v375
        %v504 = vpack.c.b16 %v489, %v488
        %v505 = vpack.c.b16 %v491, %v490
        %v506 = vpack.c.b16 %v493, %v492
        %v507 = vpack.c.b16 %v495, %v494
        %v508 = vpack.c.b16 %v497, %v496
        %v509 = vpack.c.b16 %v499, %v498
        %v510 = vpack.c.b16 %v501, %v500
        %v511 = vpack.c.b16 %v503, %v502
        %520 = vmatpush.bf16.msra.mxu0 %v511
        %521 = vmatpush.bf16.msra.mxu0 %v510
        %522 = vmatpush.bf16.msra.mxu0 %v509
        %523 = vmatpush.bf16.msra.mxu0 %v508
        %524 = vmatpush.bf16.msra.mxu0 %v507
        %525 = vmatpush.bf16.msra.mxu0 %v506
        %526 = vmatpush.bf16.msra.mxu0 %v505
        %527 = vmatpush.bf16.msra.mxu0 %v504
        %528 = vmatmul.bf16.gmra.mxu0 %v440
        %v529 = vpop.f32.mrf.mxu0
        %v530 = vadd.f32 0.0, %v529
        %v531 = vpop.f32.mrf.mxu0
        %v532 = vadd.f32 0.0, %v531
        %533 = vmatmul.bf16.gmra.mxu0 %v441
        %v534 = vpop.f32.mrf.mxu0
        %v535 = vadd.f32 0.0, %v534
        %v536 = vpop.f32.mrf.mxu0
        %v537 = vadd.f32 0.0, %v536
        %538 = vmatmul.bf16.gmra.mxu0 %v442
        %v539 = vpop.f32.mrf.mxu0
        %v540 = vadd.f32 0.0, %v539
        %v541 = vpop.f32.mrf.mxu0
        %v542 = vadd.f32 0.0, %v541
        %543 = vmatmul.bf16.gmra.mxu0 %v443
        %v544 = vpop.f32.mrf.mxu0
        %v545 = vadd.f32 0.0, %v544
        %v546 = vpop.f32.mrf.mxu0
        %v547 = vadd.f32 0.0, %v546
        %548 = vmatmul.bf16.gmra.mxu0 %v444
        %v549 = vpop.f32.mrf.mxu0
        %v550 = vadd.f32 0.0, %v549
        %v551 = vpop.f32.mrf.mxu0
        %v552 = vadd.f32 0.0, %v551
        %553 = vmatmul.bf16.gmra.mxu0 %v445
        %v554 = vpop.f32.mrf.mxu0
        %v555 = vadd.f32 0.0, %v554
        %v556 = vpop.f32.mrf.mxu0
        %v557 = vadd.f32 0.0, %v556
        %558 = vmatmul.bf16.gmra.mxu0 %v446
        %v559 = vpop.f32.mrf.mxu0
        %v560 = vadd.f32 0.0, %v559
        %v561 = vpop.f32.mrf.mxu0
        %v562 = vadd.f32 0.0, %v561
        %563 = vmatmul.bf16.gmra.mxu0 %v447
        %v564 = vpop.f32.mrf.mxu0
        %v565 = vadd.f32 0.0, %v564
        %v566 = vpop.f32.mrf.mxu0
        %v567 = vadd.f32 0.0, %v566
        %568 = vmatmul.bf16.gmra.mxu0 %v448
        %v569 = vpop.f32.mrf.mxu0
        %v570 = vadd.f32 0.0, %v569
        %v571 = vpop.f32.mrf.mxu0
        %v572 = vadd.f32 0.0, %v571
        %573 = vmatmul.bf16.gmra.mxu0 %v449
        %v574 = vpop.f32.mrf.mxu0
        %v575 = vadd.f32 0.0, %v574
        %v576 = vpop.f32.mrf.mxu0
        %v577 = vadd.f32 0.0, %v576
        %578 = vmatmul.bf16.gmra.mxu0 %v450
        %v579 = vpop.f32.mrf.mxu0
        %v580 = vadd.f32 0.0, %v579
        %v581 = vpop.f32.mrf.mxu0
        %v582 = vadd.f32 0.0, %v581
        %583 = vmatmul.bf16.gmra.mxu0 %v451
        %v584 = vpop.f32.mrf.mxu0
        %v585 = vadd.f32 0.0, %v584
        %v586 = vpop.f32.mrf.mxu0
        %v587 = vadd.f32 0.0, %v586
        %588 = vmatmul.bf16.gmra.mxu0 %v452
        %v589 = vpop.f32.mrf.mxu0
        %v590 = vadd.f32 0.0, %v589
        %v591 = vpop.f32.mrf.mxu0
        %v592 = vadd.f32 0.0, %v591
        %593 = vmatmul.bf16.gmra.mxu0 %v453
        %v594 = vpop.f32.mrf.mxu0
        %v595 = vadd.f32 0.0, %v594
        %v596 = vpop.f32.mrf.mxu0
        %v597 = vadd.f32 0.0, %v596
        %598 = vmatmul.bf16.gmra.mxu0 %v454
        %v599 = vpop.f32.mrf.mxu0
        %v600 = vadd.f32 0.0, %v599
        %v601 = vpop.f32.mrf.mxu0
        %v602 = vadd.f32 0.0, %v601
        %603 = vmatmul.bf16.gmra.mxu0 %v455
        %v604 = vpop.f32.mrf.mxu0
        %v605 = vadd.f32 0.0, %v604
        %v606 = vpop.f32.mrf.mxu0
        %v607 = vadd.f32 0.0, %v606
        %608 = vdwg.mxu0
        %v609 = vadd.f32 %v296, %v530
        %v610 = vadd.f32 %v297, %v532
        %v611 = vadd.f32 %v298, %v535
        %v612 = vadd.f32 %v299, %v537
        %v613 = vadd.f32 %v300, %v540
        %v614 = vadd.f32 %v301, %v542
        %v615 = vadd.f32 %v302, %v545
        %v616 = vadd.f32 %v303, %v547
        %v617 = vadd.f32 %v304, %v550
        %v618 = vadd.f32 %v305, %v552
        %v619 = vadd.f32 %v306, %v555
        %v620 = vadd.f32 %v307, %v557
        %v621 = vadd.f32 %v308, %v560
        %v622 = vadd.f32 %v309, %v562
        %v623 = vadd.f32 %v310, %v565
        %v624 = vadd.f32 %v311, %v567
        %v625 = vadd.f32 %v312, %v570
        %v626 = vadd.f32 %v313, %v572
        %v627 = vadd.f32 %v314, %v575
        %v628 = vadd.f32 %v315, %v577
        %v629 = vadd.f32 %v316, %v580
        %v630 = vadd.f32 %v317, %v582
        %v631 = vadd.f32 %v318, %v585
        %v632 = vadd.f32 %v319, %v587
        %v633 = vadd.f32 %v320, %v590
        %v634 = vadd.f32 %v321, %v592
        %v635 = vadd.f32 %v322, %v595
        %v636 = vadd.f32 %v323, %v597
        %v637 = vadd.f32 %v324, %v600
        %v638 = vadd.f32 %v325, %v602
        %v639 = vadd.f32 %v326, %v605
        %v640 = vadd.f32 %v327, %v607
        %641 = vst [vmem:[#allocation2] sm:$0xff] %v609
        %642 = vst [vmem:[#allocation2 + $0x8] sm:$0xff] %v610
        %643 = vst [vmem:[#allocation2 + $0x10] sm:$0xff] %v611
        %644 = vst [vmem:[#allocation2 + $0x18] sm:$0xff] %v612
        %645 = vst [vmem:[#allocation2 + $0x20] sm:$0xff] %v613
        %646 = vst [vmem:[#allocation2 + $0x28] sm:$0xff] %v614
        %647 = vst [vmem:[#allocation2 + $0x30] sm:$0xff] %v615
        %648 = vst [vmem:[#allocation2 + $0x38] sm:$0xff] %v616
        %649 = vst [vmem:[#allocation2 + $0x40] sm:$0xff] %v617
        %650 = vst [vmem:[#allocation2 + $0x48] sm:$0xff] %v618
        %651 = vst [vmem:[#allocation2 + $0x50] sm:$0xff] %v619
        %652 = vst [vmem:[#allocation2 + $0x58] sm:$0xff] %v620
        %653 = vst [vmem:[#allocation2 + $0x60] sm:$0xff] %v621
        %654 = vst [vmem:[#allocation2 + $0x68] sm:$0xff] %v622
        %655 = vst [vmem:[#allocation2 + $0x70] sm:$0xff] %v623
        %656 = vst [vmem:[#allocation2 + $0x78] sm:$0xff] %v624
        %657 = vst [vmem:[#allocation2 + $0x80] sm:$0xff] %v625
        %658 = vst [vmem:[#allocation2 + $0x88] sm:$0xff] %v626
        %659 = vst [vmem:[#allocation2 + $0x90] sm:$0xff] %v627
        %660 = vst [vmem:[#allocation2 + $0x98] sm:$0xff] %v628
        %661 = vst [vmem:[#allocation2 + $0xa0] sm:$0xff] %v629
        %662 = vst [vmem:[#allocation2 + $0xa8] sm:$0xff] %v630
        %663 = vst [vmem:[#allocation2 + $0xb0] sm:$0xff] %v631
        %664 = vst [vmem:[#allocation2 + $0xb8] sm:$0xff] %v632
        %665 = vst [vmem:[#allocation2 + $0xc0] sm:$0xff] %v633
        %666 = vst [vmem:[#allocation2 + $0xc8] sm:$0xff] %v634
        %667 = vst [vmem:[#allocation2 + $0xd0] sm:$0xff] %v635
        %668 = vst [vmem:[#allocation2 + $0xd8] sm:$0xff] %v636
        %669 = vst [vmem:[#allocation2 + $0xe0] sm:$0xff] %v637
        %670 = vst [vmem:[#allocation2 + $0xe8] sm:$0xff] %v638
        %671 = vst [vmem:[#allocation2 + $0xf0] sm:$0xff] %v639
        %672 = vst [vmem:[#allocation2 + $0xf8] sm:$0xff] %v640
        // Predicated region
        $region45: #{tpu_custom_call.1} parent=31 // pred_check
          %p673 = pneg %p260
        $region46: #{tpu_custom_call.1} parent=31 // pred_check_branch
          %675 = sbr.rel (%p673) target = $region48
        $region47: #{tpu_custom_call.1} parent=31 // pred_region
          %v676 = vld [vmem:[#allocation2] sm:$0xff]
          %v677 = vld [vmem:[#allocation2 + $0x8] sm:$0xff]
          %v678 = vld [vmem:[#allocation2 + $0x10] sm:$0xff]
          %v679 = vld [vmem:[#allocation2 + $0x18] sm:$0xff]
          %v680 = vld [vmem:[#allocation2 + $0x20] sm:$0xff]
          %v681 = vld [vmem:[#allocation2 + $0x28] sm:$0xff]
          %v682 = vld [vmem:[#allocation2 + $0x30] sm:$0xff]
          %v683 = vld [vmem:[#allocation2 + $0x38] sm:$0xff]
          %v684 = vld [vmem:[#allocation2 + $0x40] sm:$0xff]
          %v685 = vld [vmem:[#allocation2 + $0x48] sm:$0xff]
          %v686 = vld [vmem:[#allocation2 + $0x50] sm:$0xff]
          %v687 = vld [vmem:[#allocation2 + $0x58] sm:$0xff]
          %v688 = vld [vmem:[#allocation2 + $0x60] sm:$0xff]
          %v689 = vld [vmem:[#allocation2 + $0x68] sm:$0xff]
          %v690 = vld [vmem:[#allocation2 + $0x70] sm:$0xff]
          %v691 = vld [vmem:[#allocation2 + $0x78] sm:$0xff]
          %v692 = vld [vmem:[#allocation2 + $0x80] sm:$0xff]
          %v693 = vld [vmem:[#allocation2 + $0x88] sm:$0xff]
          %v694 = vld [vmem:[#allocation2 + $0x90] sm:$0xff]
          %v695 = vld [vmem:[#allocation2 + $0x98] sm:$0xff]
          %v696 = vld [vmem:[#allocation2 + $0xa0] sm:$0xff]
          %v697 = vld [vmem:[#allocation2 + $0xa8] sm:$0xff]
          %v698 = vld [vmem:[#allocation2 + $0xb0] sm:$0xff]
          %v699 = vld [vmem:[#allocation2 + $0xb8] sm:$0xff]
          %v700 = vld [vmem:[#allocation2 + $0xc0] sm:$0xff]
          %v701 = vld [vmem:[#allocation2 + $0xc8] sm:$0xff]
          %v702 = vld [vmem:[#allocation2 + $0xd0] sm:$0xff]
          %v703 = vld [vmem:[#allocation2 + $0xd8] sm:$0xff]
          %v704 = vld [vmem:[#allocation2 + $0xe0] sm:$0xff]
          %v705 = vld [vmem:[#allocation2 + $0xe8] sm:$0xff]
          %v706 = vld [vmem:[#allocation2 + $0xf0] sm:$0xff]
          %v707 = vld [vmem:[#allocation2 + $0xf8] sm:$0xff]
          %v708 = vld [vmem:[%s258] sm:$0x1]
          %v710 = vperm.slane %v708, 0
          %v712 = vadd.f32 %v676, %v710
          %v713 = vadd.f32 %v677, %v710
          %v714 = vadd.f32 %v678, %v710
          %v715 = vadd.f32 %v679, %v710
          %v716 = vadd.f32 %v680, %v710
          %v717 = vadd.f32 %v681, %v710
          %v718 = vadd.f32 %v682, %v710
          %v719 = vadd.f32 %v683, %v710
          %v720 = vadd.f32 %v684, %v710
          %v721 = vadd.f32 %v685, %v710
          %v722 = vadd.f32 %v686, %v710
          %v723 = vadd.f32 %v687, %v710
          %v724 = vadd.f32 %v688, %v710
          %v725 = vadd.f32 %v689, %v710
          %v726 = vadd.f32 %v690, %v710
          %v727 = vadd.f32 %v691, %v710
          %v728 = vadd.f32 %v692, %v710
          %v729 = vadd.f32 %v693, %v710
          %v730 = vadd.f32 %v694, %v710
          %v731 = vadd.f32 %v695, %v710
          %v732 = vadd.f32 %v696, %v710
          %v733 = vadd.f32 %v697, %v710
          %v734 = vadd.f32 %v698, %v710
          %v735 = vadd.f32 %v699, %v710
          %v736 = vadd.f32 %v700, %v710
          %v737 = vadd.f32 %v701, %v710
          %v738 = vadd.f32 %v702, %v710
          %v739 = vadd.f32 %v703, %v710
          %v740 = vadd.f32 %v704, %v710
          %v741 = vadd.f32 %v705, %v710
          %v742 = vadd.f32 %v706, %v710
          %v743 = vadd.f32 %v707, %v710
          %744 = vst [vmem:[%s253] sm:$0xff] %v712
          %745 = vst [vmem:[%s253 + $0x8] sm:$0xff] %v713
          %746 = vst [vmem:[%s253 + $0x10] sm:$0xff] %v714
          %747 = vst [vmem:[%s253 + $0x18] sm:$0xff] %v715
          %748 = vst [vmem:[%s253 + $0x20] sm:$0xff] %v716
          %749 = vst [vmem:[%s253 + $0x28] sm:$0xff] %v717
          %750 = vst [vmem:[%s253 + $0x30] sm:$0xff] %v718
          %751 = vst [vmem:[%s253 + $0x38] sm:$0xff] %v719
          %752 = vst [vmem:[%s253 + $0x40] sm:$0xff] %v720
          %753 = vst [vmem:[%s253 + $0x48] sm:$0xff] %v721
          %754 = vst [vmem:[%s253 + $0x50] sm:$0xff] %v722
          %755 = vst [vmem:[%s253 + $0x58] sm:$0xff] %v723
          %756 = vst [vmem:[%s253 + $0x60] sm:$0xff] %v724
          %757 = vst [vmem:[%s253 + $0x68] sm:$0xff] %v725
          %758 = vst [vmem:[%s253 + $0x70] sm:$0xff] %v726
          %759 = vst [vmem:[%s253 + $0x78] sm:$0xff] %v727
          %760 = vst [vmem:[%s253 + $0x80] sm:$0xff] %v728
          %761 = vst [vmem:[%s253 + $0x88] sm:$0xff] %v729
          %762 = vst [vmem:[%s253 + $0x90] sm:$0xff] %v730
          %763 = vst [vmem:[%s253 + $0x98] sm:$0xff] %v731
          %764 = vst [vmem:[%s253 + $0xa0] sm:$0xff] %v732
          %765 = vst [vmem:[%s253 + $0xa8] sm:$0xff] %v733
          %766 = vst [vmem:[%s253 + $0xb0] sm:$0xff] %v734
          %767 = vst [vmem:[%s253 + $0xb8] sm:$0xff] %v735
          %768 = vst [vmem:[%s253 + $0xc0] sm:$0xff] %v736
          %769 = vst [vmem:[%s253 + $0xc8] sm:$0xff] %v737
          %770 = vst [vmem:[%s253 + $0xd0] sm:$0xff] %v738
          %771 = vst [vmem:[%s253 + $0xd8] sm:$0xff] %v739
          %772 = vst [vmem:[%s253 + $0xe0] sm:$0xff] %v740
          %773 = vst [vmem:[%s253 + $0xe8] sm:$0xff] %v741
          %774 = vst [vmem:[%s253 + $0xf0] sm:$0xff] %v742
          %775 = vst [vmem:[%s253 + $0xf8] sm:$0xff] %v743
        $region48: #{tpu_custom_call.1} parent=31 // pred_fallthru
          _
        %s776 = sand.u32 %s132, 1
        %s777 = scalar_lea.sflag [#allocation5], %s776
        %s778 = sand.u32 %s132, 1
        %s779 = smul.addr %s778, 256
        %s780 = scalar_lea.vmem [#allocation8], %s779
        // Predicated region
        $region49: #{tpu_custom_call.1} parent=31 // pred_check
          %p781 = pneg %p142
        $region50: #{tpu_custom_call.1} parent=31 // pred_check_branch
          %783 = sbr.rel (%p781) target = $region52
        $region51: #{tpu_custom_call.1} parent=31 // pred_region
          %s784 = smul.u32 32, %s26
          %786 = vsyncadd %s777, 0
          %s787 = sadd.s32 %s27, %s784
          %s788 = smul.addr %s787, 8
          %s789 = scalar_lea.hbm %s3, %s788
          %s790 = sshll.u32 %s780, 4
          %s791 = int_to_ptr.vmem [resolvable:$true] %s790
          %s792 = sshll.u32 %s789, 4
          %s793 = int_to_ptr.hbm [resolvable:$true] %s792
          %798 = dma.vmem_to_hbm [thread:$0]  %s791, 4096, %s793, %s777, 128, 128, 8
        $region52: #{tpu_custom_call.1} parent=31 // pred_fallthru
          _
      $region32: #{tpu_custom_call.1} parent=5 // pred_fallthru
        _
      %p799 = scmp.le.s32.totalorder 2, %s16
      // Predicated region
      $region53: #{tpu_custom_call.1} parent=5 // pred_check
        %p800 = pneg %p799
      $region54: #{tpu_custom_call.1} parent=5 // pred_check_branch
        %802 = sbr.rel (%p800) target = $region56
      $region55: #{tpu_custom_call.1} parent=5 // pred_region
        %s803 = ssub.s32 %s16, 2
        // Predicated region
        $region57: #{tpu_custom_call.1} parent=55 // pred_check
          %p804 = pneg %p148
        $region58: #{tpu_custom_call.1} parent=55 // pred_check_branch
          %806 = sbr.rel (%p804) target = $region60
        $region59: #{tpu_custom_call.1} parent=55 // pred_region
          %s807 = sand.u32 %s133, 1
          %s808 = scalar_lea.sflag [#allocation5], %s807
          %s809 = sand.u32 %s133, 1
          %s810 = smul.addr %s809, 256
          %s811 = scalar_lea.vmem [#allocation8], %s810
          %813 = dma.done %s808, 4096
        $region60: #{tpu_custom_call.1} parent=55 // pred_fallthru
          _
      $region56: #{tpu_custom_call.1} parent=5 // pred_fallthru
        _
    $region6: #{tpu_custom_call.1} parent=1 // loop_footer
      %s20 = sadd.s32 1, %s16
    $region7: #{tpu_custom_call.1} parent=1 // loop_footer_branch
      %15 = sbr.rel target = $region3
    $region8: #{tpu_custom_call.1} parent=1 // loop_exit
      _
    %814 = vsyncpa [#allocation4], 1
    %s815 = scalar_lea.sflag [#allocation4], 1
    %816 = vsyncpa %s815, 1
    %817 = vsyncpa [#allocation7], 1
    %818 = vsyncpa [#allocation5], 1
    %s819 = scalar_lea.sflag [#allocation5], 1
    %820 = vsyncpa %s819, 1

</llo_original>
